<compile_context>
chip_gen: v6e
topology: v6e:2x2x1
jax: 0.10.0
libtpu: 0.0.40
codegen_flags: <defaults>
</compile_context>

<pallas_src>
import jax
import jax.numpy as jnp
from jax.experimental import pallas as pl
from jax.experimental.pallas import tpu as pltpu


def _round_up(n, m):
    return pl.cdiv(n, m) * m


def _num_tensorcores_per_chip():
    """v7x packs 2 TensorCores per chip; v5e/v6e have 1.  Fallback: 1."""
    try:
        kind = jax.devices()[0].device_kind.lower()
    except Exception:
        return 1
    if "v7" in kind or "tpu7" in kind:
        return 2
    return 1


def qnet_kernel(x_ref, w1_ref, w2_ref, w3_ref, b_ref, o_ref):
    H = w1_ref.shape[1]          # hidden width
    Ap = w3_ref.shape[1]         # lane-padded output width (>= action_dim)
    cdt = w1_ref.dtype           # MXU operand dtype (bf16)

    # fc1 + relu   (f32 accumulate, f32 bias+relu)
    h1 = jnp.dot(x_ref[...].astype(cdt), w1_ref[...],
                 preferred_element_type=jnp.float32)
    h1 = jnp.maximum(h1 + b_ref[0:1, :H], 0.0)

    # fc2 + relu
    h2 = jnp.dot(h1.astype(cdt), w2_ref[...],
                 preferred_element_type=jnp.float32)
    h2 = jnp.maximum(h2 + b_ref[1:2, :H], 0.0)

    # fc3 (no activation) -> lane-dense padded output block (bf16 store halves
    # the 64x-amplified padded HBM write stream).
    out = jnp.dot(h2.astype(cdt), w3_ref[...],
                  preferred_element_type=jnp.float32)
    o_ref[...] = (out + b_ref[2:3, :Ap]).astype(o_ref.dtype)


def qnet_forward(x, params, action_dim, *, block_b=512):
    """x: [B, state_dim] float32 -> [B, action_dim] float32 Q-values."""
    w1, w2, w3p, bpk = (params["w1"], params["w2"],
                        params["w3_pad"], params["b_packed"])
    B, D = x.shape
    H = w1.shape[1]
    Ap = w3p.shape[1]

    # --- choose grid / batch tile ---------------------------------------
    # Minimum number of steps so TB <= block_b (keeps (TB,128) f32 activations
    # well inside VMEM and bounds spill pressure, esp. on v5e).
    n_steps = max(pl.cdiv(B, block_b), 1)
    # v7x megacore: keep >= 2 "parallel" steps so both TensorCores get work
    # (only if the batch can actually be split into two >=8-row tiles).
    n_cores = _num_tensorcores_per_chip()
    if n_cores > 1 and B >= 2 * 8:
        n_steps = max(n_steps, n_cores)
    # Size the tile from B itself so padding stays tiny (no fixed 512 pad-up).
    TB = _round_up(pl.cdiv(B, n_steps), 8)
    Bp = _round_up(B, TB)
    if Bp != B:
        x = jnp.pad(x, ((0, Bp - B), (0, 0)))
    grid = (Bp // TB,)

    out_dtype = jnp.bfloat16  # halves padded-output HBM writes; upcast below

    flops = 2 * Bp * (D * H + H * H + H * Ap)
    bytes_accessed = (x.size * x.dtype.itemsize
                      + w1.size * w1.dtype.itemsize
                      + w2.size * w2.dtype.itemsize
                      + w3p.size * w3p.dtype.itemsize
                      + bpk.size * bpk.dtype.itemsize
                      + Bp * Ap * jnp.dtype(out_dtype).itemsize)
    cost = pl.CostEstimate(flops=flops, transcendentals=0,
                           bytes_accessed=int(bytes_accessed))

    out = pl.pallas_call(
        qnet_kernel,
        out_shape=jax.ShapeDtypeStruct((Bp, Ap), out_dtype),
        grid=grid,
        in_specs=[
            pl.BlockSpec((TB, D), lambda i: (i, 0)),        # streams with batch
            pl.BlockSpec(w1.shape, lambda i: (0, 0)),       # VMEM-resident
            pl.BlockSpec(w2.shape, lambda i: (0, 0)),       # VMEM-resident
            pl.BlockSpec(w3p.shape, lambda i: (0, 0)),      # VMEM-resident
            pl.BlockSpec(bpk.shape, lambda i: (0, 0)),      # packed biases
        ],
        out_specs=pl.BlockSpec((TB, Ap), lambda i: (i, 0)),
        compiler_params=pltpu.CompilerParams(
            dimension_semantics=("parallel",)),
        cost_estimate=cost,
    )(x, w1, w2, w3p, bpk)

    return out[:B, :action_dim].astype(jnp.float32)


def init_qnet_params(key, state_dim, action_dim, hidden_dim=128,
                     param_dtype=jnp.bfloat16):
    """PyTorch-style uniform(+/-1/sqrt(fan_in)) init.

    Weights -> [in, out] in `param_dtype` (bf16); fc3 weight/bias zero-padded
    to 128 output lanes; biases packed into a single f32 (3, BW) array.
    """
    ks = jax.random.split(key, 6)
    A_pad = max(_round_up(action_dim, 128), 128)
    BW = max(hidden_dim, A_pad)

    def uni(k, shape, fan_in):
        bound = 1.0 / float(fan_in) ** 0.5
        return jax.random.uniform(k, shape, jnp.float32, -bound, bound)

    w1 = uni(ks[0], (state_dim, hidden_dim), state_dim)
    b1 = uni(ks[1], (hidden_dim,), state_dim)
    w2 = uni(ks[2], (hidden_dim, hidden_dim), hidden_dim)
    b2 = uni(ks[3], (hidden_dim,), hidden_dim)
    w3 = uni(ks[4], (hidden_dim, action_dim), hidden_dim)
    b3 = uni(ks[5], (action_dim,), hidden_dim)

    w3_pad = jnp.zeros((hidden_dim, A_pad), jnp.float32).at[:, :action_dim].set(w3)
    b_packed = jnp.zeros((3, BW), jnp.float32)
    b_packed = b_packed.at[0, :hidden_dim].set(b1)
    b_packed = b_packed.at[1, :hidden_dim].set(b2)
    b_packed = b_packed.at[2, :action_dim].set(b3)

    return {
        "w1": w1.astype(param_dtype),
        "w2": w2.astype(param_dtype),
        "w3_pad": w3_pad.astype(param_dtype),
        "b_packed": b_packed,  # stays f32 (added to f32 accumulators)
    }


def qnet_reference(x, params, action_dim):
    """Pure-JAX reference using the identical bf16-weight / f32-accumulate /
    bf16-output path."""
    cdt = params["w1"].dtype
    H = params["w1"].shape[1]
    b = params["b_packed"]
    h = jnp.maximum(jnp.dot(x.astype(cdt), params["w1"],
                            preferred_element_type=jnp.float32) + b[0:1, :H], 0.0)
    h = jnp.maximum(jnp.dot(h.astype(cdt), params["w2"],
                            preferred_element_type=jnp.float32) + b[1:2, :H], 0.0)
    out = jnp.dot(h.astype(cdt), params["w3_pad"],
                  preferred_element_type=jnp.float32) + b[2:3, :]
    return out[:, :action_dim].astype(jnp.bfloat16).astype(jnp.float32)


if __name__ == "__main__":
    key = jax.random.PRNGKey(0)
    k_param, k_x1, k_x2 = jax.random.split(key, 3)

    state_dim = 4      # CartPole-like state
    action_dim = 2
    hidden_dim = 128

    params = init_qnet_params(k_param, state_dim, action_dim, hidden_dim)

    # Replay-batch sized input (single big tile on v5e/v6e, 2 tiles on v7x).
    batch = 256
    x = jax.random.normal(k_x1, (batch, state_dim), dtype=jnp.float32)
    q = jax.block_until_ready(qnet_forward(x, params, action_dim))
    q_ref = qnet_reference(x, params, action_dim)
    assert q.shape == (batch, action_dim)
    assert jnp.allclose(q, q_ref, atol=2e-2, rtol=2e-2), \
        float(jnp.max(jnp.abs(q - q_ref)))

    # Ragged batch exercises the pad-then-slice path.
    batch2 = 37
    x2 = jax.random.normal(k_x2, (batch2, state_dim), dtype=jnp.float32)
    q2 = jax.block_until_ready(qnet_forward(x2, params, action_dim))
    q2_ref = qnet_reference(x2, params, action_dim)
    assert q2.shape == (batch2, action_dim)
    assert jnp.allclose(q2, q2_ref, atol=2e-2, rtol=2e-2), \
        float(jnp.max(jnp.abs(q2 - q2_ref)))

    print("KERNEL_OK")
</pallas_src>

<mosaic_0001>
module attributes {stable_mosaic.version = 11 : i64} {
  func.func @qnet_kernel(%arg0: i32, %arg1: memref<256x4xf32, #tpu.memory_space<vmem>>, %arg2: memref<4x128xbf16, #tpu.memory_space<vmem>>, %arg3: memref<128x128xbf16, #tpu.memory_space<vmem>>, %arg4: memref<128x128xbf16, #tpu.memory_space<vmem>>, %arg5: memref<3x128xf32, #tpu.memory_space<vmem>>, %arg6: memref<256x128xbf16, #tpu.memory_space<vmem>>) attributes {dimension_semantics = [#tpu.dimension_semantics<parallel>], iteration_bounds = array<i64: 1>, scalar_prefetch = 0 : i64, scratch_operands = 0 : i64, tpu.core_type = #tpu.core_type<tc>, window_params = [{transform_indices = @transform_0, window_bounds = array<i64: 256, 4>}, {pipeline_mode = #tpu.pipeline_mode<synchronous>, transform_indices = @transform_1, window_bounds = array<i64: 4, 128>}, {pipeline_mode = #tpu.pipeline_mode<synchronous>, transform_indices = @transform_2, window_bounds = array<i64: 128, 128>}, {pipeline_mode = #tpu.pipeline_mode<synchronous>, transform_indices = @transform_3, window_bounds = array<i64: 128, 128>}, {pipeline_mode = #tpu.pipeline_mode<synchronous>, transform_indices = @transform_4, window_bounds = array<i64: 3, 128>}, {transform_indices = @transform_5, window_bounds = array<i64: 256, 128>}]} {
    %c0 = arith.constant 0 : index
    %c0_0 = arith.constant 0 : index
    %0 = vector.load %arg1[%c0, %c0_0] : memref<256x4xf32, #tpu.memory_space<vmem>>, vector<256x4xf32>
    %1 = arith.truncf %0 : vector<256x4xf32> to vector<256x4xbf16>
    %c0_1 = arith.constant 0 : index
    %c0_2 = arith.constant 0 : index
    %2 = vector.load %arg2[%c0_1, %c0_2] : memref<4x128xbf16, #tpu.memory_space<vmem>>, vector<4x128xbf16>
    %cst = arith.constant dense<0.000000e+00> : vector<256x128xf32>
    %3 = tpu.matmul %1, %2, %cst {dimension_numbers = #tpu.dot_dimension_numbers<[1], [0], [0], [1], [0, 0, 1, 1], [], []>} : vector<256x4xbf16>, vector<4x128xbf16>, vector<256x128xf32> -> vector<256x128xf32>
    %c0_3 = arith.constant 0 : index
    %c0_4 = arith.constant 0 : index
    %4 = vector.load %arg5[%c0_3, %c0_4] : memref<3x128xf32, #tpu.memory_space<vmem>>, vector<1x128xf32>
    %5 = vector.broadcast %4 : vector<1x128xf32> to vector<256x128xf32>
    %6 = arith.addf %3, %5 : vector<256x128xf32>
    %cst_5 = arith.constant 0.000000e+00 : f32
    %7 = vector.broadcast %cst_5 : f32 to vector<256x128xf32>
    %8 = arith.maximumf %6, %7 : vector<256x128xf32>
    %9 = arith.truncf %8 : vector<256x128xf32> to vector<256x128xbf16>
    %c0_6 = arith.constant 0 : index
    %c0_7 = arith.constant 0 : index
    %10 = vector.load %arg3[%c0_6, %c0_7] : memref<128x128xbf16, #tpu.memory_space<vmem>>, vector<128x128xbf16>
    %cst_8 = arith.constant dense<0.000000e+00> : vector<256x128xf32>
    %11 = tpu.matmul %9, %10, %cst_8 {dimension_numbers = #tpu.dot_dimension_numbers<[1], [0], [0], [1], [0, 0, 1, 1], [], []>} : vector<256x128xbf16>, vector<128x128xbf16>, vector<256x128xf32> -> vector<256x128xf32>
    %c1 = arith.constant 1 : index
    %c0_9 = arith.constant 0 : index
    %12 = vector.load %arg5[%c1, %c0_9] : memref<3x128xf32, #tpu.memory_space<vmem>>, vector<1x128xf32>
    %13 = vector.broadcast %12 : vector<1x128xf32> to vector<256x128xf32>
    %14 = arith.addf %11, %13 : vector<256x128xf32>
    %cst_10 = arith.constant 0.000000e+00 : f32
    %15 = vector.broadcast %cst_10 : f32 to vector<256x128xf32>
    %16 = arith.maximumf %14, %15 : vector<256x128xf32>
    %17 = arith.truncf %16 : vector<256x128xf32> to vector<256x128xbf16>
    %c0_11 = arith.constant 0 : index
    %c0_12 = arith.constant 0 : index
    %18 = vector.load %arg4[%c0_11, %c0_12] : memref<128x128xbf16, #tpu.memory_space<vmem>>, vector<128x128xbf16>
    %cst_13 = arith.constant dense<0.000000e+00> : vector<256x128xf32>
    %19 = tpu.matmul %17, %18, %cst_13 {dimension_numbers = #tpu.dot_dimension_numbers<[1], [0], [0], [1], [0, 0, 1, 1], [], []>} : vector<256x128xbf16>, vector<128x128xbf16>, vector<256x128xf32> -> vector<256x128xf32>
    %c2 = arith.constant 2 : index
    %c0_14 = arith.constant 0 : index
    %20 = vector.load %arg5[%c2, %c0_14] : memref<3x128xf32, #tpu.memory_space<vmem>>, vector<1x128xf32>
    %21 = vector.broadcast %20 : vector<1x128xf32> to vector<256x128xf32>
    %22 = arith.addf %19, %21 : vector<256x128xf32>
    %23 = arith.truncf %22 : vector<256x128xf32> to vector<256x128xbf16>
    %c0_15 = arith.constant 0 : index
    %c0_16 = arith.constant 0 : index
    %24 = vector.load %arg6[%c0_15, %c0_16] : memref<256x128xbf16, #tpu.memory_space<vmem>>, vector<256x128xbf16>
    tpu.vector_store %arg6[%c0_15, %c0_16], %23 {strides = array<i32>} : memref<256x128xbf16, #tpu.memory_space<vmem>>, vector<256x128xbf16>,
    return
  }
  func.func @transform_0(%arg0: i32) -> (i32, i32) {
    %c0_i32 = arith.constant 0 : i32
    %c0_i32_0 = arith.constant 0 : i32
    return %arg0, %c0_i32 : i32, i32
  }
  func.func @transform_1(%arg0: i32) -> (i32, i32) {
    %c0_i32 = arith.constant 0 : i32
    %c0_i32_0 = arith.constant 0 : i32
    %c0_i32_1 = arith.constant 0 : i32
    return %c0_i32, %c0_i32_0 : i32, i32
  }
  func.func @transform_2(%arg0: i32) -> (i32, i32) {
    %c0_i32 = arith.constant 0 : i32
    %c0_i32_0 = arith.constant 0 : i32
    %c0_i32_1 = arith.constant 0 : i32
    return %c0_i32, %c0_i32_0 : i32, i32
  }
  func.func @transform_3(%arg0: i32) -> (i32, i32) {
    %c0_i32 = arith.constant 0 : i32
    %c0_i32_0 = arith.constant 0 : i32
    %c0_i32_1 = arith.constant 0 : i32
    return %c0_i32, %c0_i32_0 : i32, i32
  }
  func.func @transform_4(%arg0: i32) -> (i32, i32) {
    %c0_i32 = arith.constant 0 : i32
    %c0_i32_0 = arith.constant 0 : i32
    %c0_i32_1 = arith.constant 0 : i32
    return %c0_i32, %c0_i32_0 : i32, i32
  }
  func.func @transform_5(%arg0: i32) -> (i32, i32) {
    %c0_i32 = arith.constant 0 : i32
    %c0_i32_0 = arith.constant 0 : i32
    return %arg0, %c0_i32 : i32, i32
  }
}

</mosaic_0001>

<llo_original>
// kernel: tpu_custom_call.1
$region0: #{tpu_custom_call.1}
  #allocation0 [shape = 'u32[]', space=smem, size = 0x4, offset = 0x4, fixed_abs, tag = 'smem constant byte address 0x4 - core index']
  #allocation1 [shape = 'u32[144,128]{1,0:T(1,128)}', space=vmem, size = 0x12000, scoped, tag = 'internal scratch']
  %s0 = inlined_call_operand.vmem [shape: f32[256,4], index: 0, kind: input, shape index: {}]
  %s1 = inlined_call_operand.vmem [shape: bf16[4,128], index: 1, kind: input, shape index: {}]
  %s2 = inlined_call_operand.vmem [shape: bf16[128,128], index: 2, kind: input, shape index: {}]
  %s3 = inlined_call_operand.vmem [shape: bf16[128,128], index: 3, kind: input, shape index: {}]
  %s4 = inlined_call_operand.vmem [shape: f32[3,128], index: 4, kind: input, shape index: {}]
  %s5 = inlined_call_operand.hbm [shape: bf16[256,128], index: 5, kind: output, shape index: {}]
  %s6 = sld [smem:[#allocation0]]
  $region30: #{tpu_custom_call.1} parent=0
    _
  %s8 = ssub.s32 1, %s6
  %s9 = scalar_select 0, %s8, %s6
  $region1: #{tpu_custom_call.1} parent=0
    #allocation2 [shape = 'u8[65536]{0}', space=vmem, size = 0x10000, scoped, tag = 'output window, operand 0, single buffered']
    #allocation3 [shape = 's32[1]{0}', space=sflag, size = 0x4, scoped, tag = 'scoped memory for tpu_custom_call.1']
    %10 = vsyncpa [#allocation3], 0
    // Predicated region
    $region2: #{tpu_custom_call.1} parent=1 // pred_check
      _
    $region3: #{tpu_custom_call.1} parent=1 // pred_check_branch
      %12 = sbr.rel (0) target = $region5
    $region4: #{tpu_custom_call.1} parent=1 // pred_region
      _
    $region5: #{tpu_custom_call.1} parent=1 // pred_fallthru
      _
    // Predicated region
    $region6: #{tpu_custom_call.1} parent=1 // pred_check
      _
    $region7: #{tpu_custom_call.1} parent=1 // pred_check_branch
      %14 = sbr.rel (0) target = $region9
    $region8: #{tpu_custom_call.1} parent=1 // pred_region
      _
    $region9: #{tpu_custom_call.1} parent=1 // pred_fallthru
      _
    // Predicated region
    $region10: #{tpu_custom_call.1} parent=1 // pred_check
      _
    $region11: #{tpu_custom_call.1} parent=1 // pred_check_branch
      %16 = sbr.rel (0) target = $region13
    $region12: #{tpu_custom_call.1} parent=1 // pred_region
      _
    $region13: #{tpu_custom_call.1} parent=1 // pred_fallthru
      _
    // Predicated region
    $region14: #{tpu_custom_call.1} parent=1 // pred_check
      _
    $region15: #{tpu_custom_call.1} parent=1 // pred_check_branch
      %18 = sbr.rel (0) target = $region17
    $region16: #{tpu_custom_call.1} parent=1 // pred_region
      _
    $region17: #{tpu_custom_call.1} parent=1 // pred_fallthru
      _
    // Predicated region
    $region18: #{tpu_custom_call.1} parent=1 // pred_check
      _
    $region19: #{tpu_custom_call.1} parent=1 // pred_check_branch
      %20 = sbr.rel (0) target = $region21
    $region20: #{tpu_custom_call.1} parent=1 // pred_region
      _
    $region21: #{tpu_custom_call.1} parent=1 // pred_fallthru
      _
    %v22 = vld [vmem:[%s0] sm:$0xff]
    %v23 = vld [vmem:[%s0 + $0x8] sm:$0xff]
    %v24 = vld [vmem:[%s0 + $0x10] sm:$0xff]
    %v25 = vld [vmem:[%s0 + $0x18] sm:$0xff]
    %v26 = vld [vmem:[%s0 + $0x20] sm:$0xff]
    %v27 = vld [vmem:[%s0 + $0x28] sm:$0xff]
    %v28 = vld [vmem:[%s0 + $0x30] sm:$0xff]
    %v29 = vld [vmem:[%s0 + $0x38] sm:$0xff]
    %v30 = vld [vmem:[%s0 + $0x40] sm:$0xff]
    %v31 = vld [vmem:[%s0 + $0x48] sm:$0xff]
    %v32 = vld [vmem:[%s0 + $0x50] sm:$0xff]
    %v33 = vld [vmem:[%s0 + $0x58] sm:$0xff]
    %v34 = vld [vmem:[%s0 + $0x60] sm:$0xff]
    %v35 = vld [vmem:[%s0 + $0x68] sm:$0xff]
    %v36 = vld [vmem:[%s0 + $0x70] sm:$0xff]
    %v37 = vld [vmem:[%s0 + $0x78] sm:$0xff]
    %v38 = vld [vmem:[%s0 + $0x80] sm:$0xff]
    %v39 = vld [vmem:[%s0 + $0x88] sm:$0xff]
    %v40 = vld [vmem:[%s0 + $0x90] sm:$0xff]
    %v41 = vld [vmem:[%s0 + $0x98] sm:$0xff]
    %v42 = vld [vmem:[%s0 + $0xa0] sm:$0xff]
    %v43 = vld [vmem:[%s0 + $0xa8] sm:$0xff]
    %v44 = vld [vmem:[%s0 + $0xb0] sm:$0xff]
    %v45 = vld [vmem:[%s0 + $0xb8] sm:$0xff]
    %v46 = vld [vmem:[%s0 + $0xc0] sm:$0xff]
    %v47 = vld [vmem:[%s0 + $0xc8] sm:$0xff]
    %v48 = vld [vmem:[%s0 + $0xd0] sm:$0xff]
    %v49 = vld [vmem:[%s0 + $0xd8] sm:$0xff]
    %v50 = vld [vmem:[%s0 + $0xe0] sm:$0xff]
    %v51 = vld [vmem:[%s0 + $0xe8] sm:$0xff]
    %v52 = vld [vmem:[%s0 + $0xf0] sm:$0xff]
    %v53 = vld [vmem:[%s0 + $0xf8] sm:$0xff]
    %v54 = vpack.c.bf16 %v23, %v22
    %v55 = vpack.c.bf16 %v25, %v24
    %v56 = vpack.c.bf16 %v27, %v26
    %v57 = vpack.c.bf16 %v29, %v28
    %v58 = vpack.c.bf16 %v31, %v30
    %v59 = vpack.c.bf16 %v33, %v32
    %v60 = vpack.c.bf16 %v35, %v34
    %v61 = vpack.c.bf16 %v37, %v36
    %v62 = vpack.c.bf16 %v39, %v38
    %v63 = vpack.c.bf16 %v41, %v40
    %v64 = vpack.c.bf16 %v43, %v42
    %v65 = vpack.c.bf16 %v45, %v44
    %v66 = vpack.c.bf16 %v47, %v46
    %v67 = vpack.c.bf16 %v49, %v48
    %v68 = vpack.c.bf16 %v51, %v50
    %v69 = vpack.c.bf16 %v53, %v52
    %v70 = vld [vmem:[%s1] sm:$0x3]
    %v71 = vld [vmem:[%s4] sm:$0x1]
    %v72 = vlaneseq
    %v73 = vshrl.u32 %v72, 7
    %v74 = vsub.s32 0, %v73
    %v75 = vrot.slane %v71, %v74
    %vm76 = vcmask 31744
    %v78 = vsel %vm76, %v54, 0
    %v81 = vsel %vm76, %v55, 0
    %v84 = vsel %vm76, %v56, 0
    %v87 = vsel %vm76, %v57, 0
    %v90 = vsel %vm76, %v58, 0
    %v93 = vsel %vm76, %v59, 0
    %v96 = vsel %vm76, %v60, 0
    %v99 = vsel %vm76, %v61, 0
    %v102 = vsel %vm76, %v62, 0
    %v105 = vsel %vm76, %v63, 0
    %v108 = vsel %vm76, %v64, 0
    %v111 = vsel %vm76, %v65, 0
    %v114 = vsel %vm76, %v66, 0
    %v117 = vsel %vm76, %v67, 0
    %v120 = vsel %vm76, %v68, 0
    %v123 = vsel %vm76, %v69, 0
    %vm125 = vcmask 1041408
    %v127 = vsel %vm125, %v70, 0
    %129 = vmatprep.subr.bf16.mxu0 0
    %130 = vmatpush1.bf16.msra.mxu0 0
    %131 = vmatprep.subr.bf16.mxu0 0
    %132 = vmatpush1.bf16.msra.mxu0 0
    %133 = vmatprep.subr.bf16.mxu0 0
    %134 = vmatpush1.bf16.msra.mxu0 0
    %135 = vmatprep.subr.bf16.mxu0 0
    %136 = vmatpush1.bf16.msra.mxu0 0
    %137 = vmatprep.subr.bf16.mxu0 0
    %138 = vmatpush1.bf16.msra.mxu0 0
    %139 = vmatprep.subr.bf16.mxu0 0
    %140 = vmatpush1.bf16.msra.mxu0 0
    %141 = vmatprep.subr.bf16.mxu0 0
    %142 = vmatpush1.bf16.msra.mxu0 0
    %143 = vmatprep.subr.bf16.mxu0 0
    %144 = vmatpush1.bf16.msra.mxu0 %v127
    %145 = vmatprep.subr.bf16.mxu0 0
    %146 = vmatpush2.bf16.msra.mxu0 0
    %147 = vmatprep.subr.bf16.mxu0 0
    %148 = vmatpush2.bf16.msra.mxu0 0
    %149 = vmatprep.subr.bf16.mxu0 0
    %150 = vmatpush2.bf16.msra.mxu0 0
    %151 = vmatprep.subr.bf16.mxu0 0
    %152 = vmatpush2.bf16.msra.mxu0 0
    %153 = vmatprep.subr.bf16.mxu0 0
    %154 = vmatpush2.bf16.msra.mxu0 0
    %155 = vmatprep.subr.bf16.mxu0 0
    %156 = vmatpush2.bf16.msra.mxu0 0
    %157 = vmatprep.subr.bf16.mxu0 0
    %158 = vmatpush2.bf16.msra.mxu0 0
    %159 = vmatprep.subr.bf16.mxu0 0
    %160 = vmatpush2.bf16.msra.mxu0 0
    %161 = vmatprep.mubr.bf16.mxu0 0
    %162 = vmatmul.mubr.bf16.gmra.mxu0 %v78
    %v163 = vpop.f32.mrf.mxu0
    %v164 = vadd.f32 %v75, %v163
    %v165 = vpop.f32.mrf.mxu0
    %v166 = vpop.f32.mrf.mxu0
    %v167 = vadd.f32 %v75, %v166
    %v168 = vpop.f32.mrf.mxu0
    %169 = vmatprep.mubr.bf16.mxu0 0
    %170 = vmatmul.mubr.bf16.gmra.mxu0 %v81
    %v171 = vpop.f32.mrf.mxu0
    %v172 = vadd.f32 %v75, %v171
    %v173 = vpop.f32.mrf.mxu0
    %v174 = vpop.f32.mrf.mxu0
    %v175 = vadd.f32 %v75, %v174
    %v176 = vpop.f32.mrf.mxu0
    %177 = vmatprep.mubr.bf16.mxu0 0
    %178 = vmatmul.mubr.bf16.gmra.mxu0 %v84
    %v179 = vpop.f32.mrf.mxu0
    %v180 = vadd.f32 %v75, %v179
    %v181 = vpop.f32.mrf.mxu0
    %v182 = vpop.f32.mrf.mxu0
    %v183 = vadd.f32 %v75, %v182
    %v184 = vpop.f32.mrf.mxu0
    %185 = vmatprep.mubr.bf16.mxu0 0
    %186 = vmatmul.mubr.bf16.gmra.mxu0 %v87
    %v187 = vpop.f32.mrf.mxu0
    %v188 = vadd.f32 %v75, %v187
    %v189 = vpop.f32.mrf.mxu0
    %v190 = vpop.f32.mrf.mxu0
    %v191 = vadd.f32 %v75, %v190
    %v192 = vpop.f32.mrf.mxu0
    %193 = vmatprep.mubr.bf16.mxu0 0
    %194 = vmatmul.mubr.bf16.gmra.mxu0 %v90
    %v195 = vpop.f32.mrf.mxu0
    %v196 = vadd.f32 %v75, %v195
    %v197 = vpop.f32.mrf.mxu0
    %v198 = vpop.f32.mrf.mxu0
    %v199 = vadd.f32 %v75, %v198
    %v200 = vpop.f32.mrf.mxu0
    %201 = vmatprep.mubr.bf16.mxu0 0
    %202 = vmatmul.mubr.bf16.gmra.mxu0 %v93
    %v203 = vpop.f32.mrf.mxu0
    %v204 = vadd.f32 %v75, %v203
    %v205 = vpop.f32.mrf.mxu0
    %v206 = vpop.f32.mrf.mxu0
    %v207 = vadd.f32 %v75, %v206
    %v208 = vpop.f32.mrf.mxu0
    %209 = vmatprep.mubr.bf16.mxu0 0
    %210 = vmatmul.mubr.bf16.gmra.mxu0 %v96
    %v211 = vpop.f32.mrf.mxu0
    %v212 = vadd.f32 %v75, %v211
    %v213 = vpop.f32.mrf.mxu0
    %v214 = vpop.f32.mrf.mxu0
    %v215 = vadd.f32 %v75, %v214
    %v216 = vpop.f32.mrf.mxu0
    %217 = vmatprep.mubr.bf16.mxu0 0
    %218 = vmatmul.mubr.bf16.gmra.mxu0 %v99
    %v219 = vpop.f32.mrf.mxu0
    %v220 = vadd.f32 %v75, %v219
    %v221 = vpop.f32.mrf.mxu0
    %v222 = vpop.f32.mrf.mxu0
    %v223 = vadd.f32 %v75, %v222
    %v224 = vpop.f32.mrf.mxu0
    %225 = vmatprep.mubr.bf16.mxu0 0
    %226 = vmatmul.mubr.bf16.gmra.mxu0 %v102
    %v227 = vpop.f32.mrf.mxu0
    %v228 = vadd.f32 %v75, %v227
    %v229 = vpop.f32.mrf.mxu0
    %v230 = vpop.f32.mrf.mxu0
    %v231 = vadd.f32 %v75, %v230
    %v232 = vpop.f32.mrf.mxu0
    %233 = vmatprep.mubr.bf16.mxu0 0
    %234 = vmatmul.mubr.bf16.gmra.mxu0 %v105
    %v235 = vpop.f32.mrf.mxu0
    %v236 = vadd.f32 %v75, %v235
    %v237 = vpop.f32.mrf.mxu0
    %v238 = vpop.f32.mrf.mxu0
    %v239 = vadd.f32 %v75, %v238
    %v240 = vpop.f32.mrf.mxu0
    %241 = vmatprep.mubr.bf16.mxu0 0
    %242 = vmatmul.mubr.bf16.gmra.mxu0 %v108
    %v243 = vpop.f32.mrf.mxu0
    %v244 = vadd.f32 %v75, %v243
    %v245 = vpop.f32.mrf.mxu0
    %v246 = vpop.f32.mrf.mxu0
    %v247 = vadd.f32 %v75, %v246
    %v248 = vpop.f32.mrf.mxu0
    %249 = vmatprep.mubr.bf16.mxu0 0
    %250 = vmatmul.mubr.bf16.gmra.mxu0 %v111
    %v251 = vpop.f32.mrf.mxu0
    %v252 = vadd.f32 %v75, %v251
    %v253 = vpop.f32.mrf.mxu0
    %v254 = vpop.f32.mrf.mxu0
    %v255 = vadd.f32 %v75, %v254
    %v256 = vpop.f32.mrf.mxu0
    %257 = vmatprep.mubr.bf16.mxu0 0
    %258 = vmatmul.mubr.bf16.gmra.mxu0 %v114
    %v259 = vpop.f32.mrf.mxu0
    %v260 = vadd.f32 %v75, %v259
    %v261 = vpop.f32.mrf.mxu0
    %v262 = vpop.f32.mrf.mxu0
    %v263 = vadd.f32 %v75, %v262
    %v264 = vpop.f32.mrf.mxu0
    %265 = vmatprep.mubr.bf16.mxu0 0
    %266 = vmatmul.mubr.bf16.gmra.mxu0 %v117
    %v267 = vpop.f32.mrf.mxu0
    %v268 = vadd.f32 %v75, %v267
    %v269 = vpop.f32.mrf.mxu0
    %v270 = vpop.f32.mrf.mxu0
    %v271 = vadd.f32 %v75, %v270
    %v272 = vpop.f32.mrf.mxu0
    %273 = vmatprep.mubr.bf16.mxu0 0
    %274 = vmatmul.mubr.bf16.gmra.mxu0 %v120
    %v275 = vpop.f32.mrf.mxu0
    %v276 = vadd.f32 %v75, %v275
    %v277 = vpop.f32.mrf.mxu0
    %v278 = vpop.f32.mrf.mxu0
    %v279 = vadd.f32 %v75, %v278
    %v280 = vpop.f32.mrf.mxu0
    %281 = vmatprep.mubr.bf16.mxu0 0
    %282 = vmatmul.mubr.bf16.gmra.mxu0 %v123
    %v283 = vpop.f32.mrf.mxu0
    %v284 = vadd.f32 %v75, %v283
    %v285 = vpop.f32.mrf.mxu0
    %v286 = vpop.f32.mrf.mxu0
    %v287 = vadd.f32 %v75, %v286
    %v288 = vpop.f32.mrf.mxu0
    %289 = vdwg.mxu0
    %v290 = vmax.f32 %v164, 0.0
    %v291 = vmax.f32 %v167, 0.0
    %v292 = vmax.f32 %v172, 0.0
    %v293 = vmax.f32 %v175, 0.0
    %v294 = vmax.f32 %v180, 0.0
    %v295 = vmax.f32 %v183, 0.0
    %v296 = vmax.f32 %v188, 0.0
    %v297 = vmax.f32 %v191, 0.0
    %v298 = vmax.f32 %v196, 0.0
    %v299 = vmax.f32 %v199, 0.0
    %v300 = vmax.f32 %v204, 0.0
    %v301 = vmax.f32 %v207, 0.0
    %v302 = vmax.f32 %v212, 0.0
    %v303 = vmax.f32 %v215, 0.0
    %v304 = vmax.f32 %v220, 0.0
    %v305 = vmax.f32 %v223, 0.0
    %v306 = vmax.f32 %v228, 0.0
    %v307 = vmax.f32 %v231, 0.0
    %v308 = vmax.f32 %v236, 0.0
    %v309 = vmax.f32 %v239, 0.0
    %v310 = vmax.f32 %v244, 0.0
    %v311 = vmax.f32 %v247, 0.0
    %v312 = vmax.f32 %v252, 0.0
    %v313 = vmax.f32 %v255, 0.0
    %v314 = vmax.f32 %v260, 0.0
    %v315 = vmax.f32 %v263, 0.0
    %v316 = vmax.f32 %v268, 0.0
    %v317 = vmax.f32 %v271, 0.0
    %v318 = vmax.f32 %v276, 0.0
    %v319 = vmax.f32 %v279, 0.0
    %v320 = vmax.f32 %v284, 0.0
    %v321 = vmax.f32 %v287, 0.0
    %v322 = vpack.c.bf16 %v291, %v290
    %v323 = vpack.c.bf16 %v293, %v292
    %v324 = vpack.c.bf16 %v295, %v294
    %v325 = vpack.c.bf16 %v297, %v296
    %v326 = vpack.c.bf16 %v299, %v298
    %v327 = vpack.c.bf16 %v301, %v300
    %v328 = vpack.c.bf16 %v303, %v302
    %v329 = vpack.c.bf16 %v305, %v304
    %v330 = vpack.c.bf16 %v307, %v306
    %v331 = vpack.c.bf16 %v309, %v308
    %v332 = vpack.c.bf16 %v311, %v310
    %v333 = vpack.c.bf16 %v313, %v312
    %v334 = vpack.c.bf16 %v315, %v314
    %v335 = vpack.c.bf16 %v317, %v316
    %v336 = vpack.c.bf16 %v319, %v318
    %v337 = vpack.c.bf16 %v321, %v320
    %v338 = vld [vmem:[%s2] sm:$0xf]
    %v339 = vld [vmem:[%s2 + $0x4] sm:$0xf]
    %v340 = vld [vmem:[%s2 + $0x8] sm:$0xf]
    %v341 = vld [vmem:[%s2 + $0xc] sm:$0xf]
    %v342 = vld [vmem:[%s2 + $0x10] sm:$0xf]
    %v343 = vld [vmem:[%s2 + $0x14] sm:$0xf]
    %v344 = vld [vmem:[%s2 + $0x18] sm:$0xf]
    %v345 = vld [vmem:[%s2 + $0x1c] sm:$0xf]
    %v346 = vld [vmem:[%s2 + $0x20] sm:$0xf]
    %v347 = vld [vmem:[%s2 + $0x24] sm:$0xf]
    %v348 = vld [vmem:[%s2 + $0x28] sm:$0xf]
    %v349 = vld [vmem:[%s2 + $0x2c] sm:$0xf]
    %v350 = vld [vmem:[%s2 + $0x30] sm:$0xf]
    %v351 = vld [vmem:[%s2 + $0x34] sm:$0xf]
    %v352 = vld [vmem:[%s2 + $0x38] sm:$0xf]
    %v353 = vld [vmem:[%s2 + $0x3c] sm:$0xf]
    %v354 = vld [vmem:[%s4 + $0x1] sm:$0x1]
    %v355 = vlaneseq
    %v356 = vshrl.u32 %v355, 7
    %v357 = vsub.s32 0, %v356
    %v358 = vrot.slane %v354, %v357
    %v375 = vunpack.c.l.b16 %v338
    %v376 = vunpack.c.l.b16 %v339
    %v377 = vunpack.c.l.b16 %v340
    %v378 = vunpack.c.l.b16 %v341
    %v379 = vunpack.c.l.b16 %v342
    %v380 = vunpack.c.l.b16 %v343
    %v381 = vunpack.c.l.b16 %v344
    %v382 = vunpack.c.l.b16 %v345
    %v383 = vunpack.c.l.b16 %v346
    %v384 = vunpack.c.l.b16 %v347
    %v385 = vunpack.c.l.b16 %v348
    %v386 = vunpack.c.l.b16 %v349
    %v387 = vunpack.c.l.b16 %v350
    %v388 = vunpack.c.l.b16 %v351
    %v389 = vunpack.c.l.b16 %v352
    %v390 = vunpack.c.l.b16 %v353
    %v391 = vpack.c.b16 %v376, %v375
    %v392 = vpack.c.b16 %v378, %v377
    %v393 = vpack.c.b16 %v380, %v379
    %v394 = vpack.c.b16 %v382, %v381
    %v395 = vpack.c.b16 %v384, %v383
    %v396 = vpack.c.b16 %v386, %v385
    %v397 = vpack.c.b16 %v388, %v387
    %v398 = vpack.c.b16 %v390, %v389
    %407 = vmatprep.subr.bf16.mxu0 0
    %408 = vmatpush1.bf16.msra.mxu0 %v398
    %409 = vmatprep.subr.bf16.mxu0 0
    %410 = vmatpush1.bf16.msra.mxu0 %v397
    %411 = vmatprep.subr.bf16.mxu0 0
    %412 = vmatpush1.bf16.msra.mxu0 %v396
    %413 = vmatprep.subr.bf16.mxu0 0
    %414 = vmatpush1.bf16.msra.mxu0 %v395
    %415 = vmatprep.subr.bf16.mxu0 0
    %416 = vmatpush1.bf16.msra.mxu0 %v394
    %417 = vmatprep.subr.bf16.mxu0 0
    %418 = vmatpush1.bf16.msra.mxu0 %v393
    %419 = vmatprep.subr.bf16.mxu0 0
    %420 = vmatpush1.bf16.msra.mxu0 %v392
    %421 = vmatprep.subr.bf16.mxu0 0
    %422 = vmatpush1.bf16.msra.mxu0 %v391
    %423 = vmatprep.subr.bf16.mxu0 0
    %424 = vmatpush2.bf16.msra.mxu0 0
    %425 = vmatprep.subr.bf16.mxu0 0
    %426 = vmatpush2.bf16.msra.mxu0 0
    %427 = vmatprep.subr.bf16.mxu0 0
    %428 = vmatpush2.bf16.msra.mxu0 0
    %429 = vmatprep.subr.bf16.mxu0 0
    %430 = vmatpush2.bf16.msra.mxu0 0
    %431 = vmatprep.subr.bf16.mxu0 0
    %432 = vmatpush2.bf16.msra.mxu0 0
    %433 = vmatprep.subr.bf16.mxu0 0
    %434 = vmatpush2.bf16.msra.mxu0 0
    %435 = vmatprep.subr.bf16.mxu0 0
    %436 = vmatpush2.bf16.msra.mxu0 0
    %437 = vmatprep.subr.bf16.mxu0 0
    %438 = vmatpush2.bf16.msra.mxu0 0
    %439 = vmatprep.mubr.bf16.mxu0 0
    %440 = vmatmul.mubr.bf16.gmra.mxu0 %v322
    %v441 = vpop.f32.mrf.mxu0
    %v442 = vadd.f32 %v358, %v441
    %v443 = vpop.f32.mrf.mxu0
    %v444 = vpop.f32.mrf.mxu0
    %v445 = vadd.f32 %v358, %v444
    %v446 = vpop.f32.mrf.mxu0
    %447 = vmatprep.mubr.bf16.mxu0 0
    %448 = vmatmul.mubr.bf16.gmra.mxu0 %v323
    %v449 = vpop.f32.mrf.mxu0
    %v450 = vadd.f32 %v358, %v449
    %v451 = vpop.f32.mrf.mxu0
    %v452 = vpop.f32.mrf.mxu0
    %v453 = vadd.f32 %v358, %v452
    %v454 = vpop.f32.mrf.mxu0
    %455 = vmatprep.mubr.bf16.mxu0 0
    %456 = vmatmul.mubr.bf16.gmra.mxu0 %v324
    %v457 = vpop.f32.mrf.mxu0
    %v458 = vadd.f32 %v358, %v457
    %v459 = vpop.f32.mrf.mxu0
    %v460 = vpop.f32.mrf.mxu0
    %v461 = vadd.f32 %v358, %v460
    %v462 = vpop.f32.mrf.mxu0
    %463 = vmatprep.mubr.bf16.mxu0 0
    %464 = vmatmul.mubr.bf16.gmra.mxu0 %v325
    %v465 = vpop.f32.mrf.mxu0
    %v466 = vadd.f32 %v358, %v465
    %v467 = vpop.f32.mrf.mxu0
    %v468 = vpop.f32.mrf.mxu0
    %v469 = vadd.f32 %v358, %v468
    %v470 = vpop.f32.mrf.mxu0
    %471 = vmatprep.mubr.bf16.mxu0 0
    %472 = vmatmul.mubr.bf16.gmra.mxu0 %v326
    %v473 = vpop.f32.mrf.mxu0
    %v474 = vadd.f32 %v358, %v473
    %v475 = vpop.f32.mrf.mxu0
    %v476 = vpop.f32.mrf.mxu0
    %v477 = vadd.f32 %v358, %v476
    %v478 = vpop.f32.mrf.mxu0
    %479 = vmatprep.mubr.bf16.mxu0 0
    %480 = vmatmul.mubr.bf16.gmra.mxu0 %v327
    %v481 = vpop.f32.mrf.mxu0
    %v482 = vadd.f32 %v358, %v481
    %v483 = vpop.f32.mrf.mxu0
    %v484 = vpop.f32.mrf.mxu0
    %v485 = vadd.f32 %v358, %v484
    %v486 = vpop.f32.mrf.mxu0
    %487 = vmatprep.mubr.bf16.mxu0 0
    %488 = vmatmul.mubr.bf16.gmra.mxu0 %v328
    %v489 = vpop.f32.mrf.mxu0
    %v490 = vadd.f32 %v358, %v489
    %v491 = vpop.f32.mrf.mxu0
    %v492 = vpop.f32.mrf.mxu0
    %v493 = vadd.f32 %v358, %v492
    %v494 = vpop.f32.mrf.mxu0
    %495 = vmatprep.mubr.bf16.mxu0 0
    %496 = vmatmul.mubr.bf16.gmra.mxu0 %v329
    %v497 = vpop.f32.mrf.mxu0
    %v498 = vadd.f32 %v358, %v497
    %v499 = vpop.f32.mrf.mxu0
    %v500 = vpop.f32.mrf.mxu0
    %v501 = vadd.f32 %v358, %v500
    %v502 = vpop.f32.mrf.mxu0
    %503 = vmatprep.mubr.bf16.mxu0 0
    %504 = vmatmul.mubr.bf16.gmra.mxu0 %v330
    %v505 = vpop.f32.mrf.mxu0
    %v506 = vadd.f32 %v358, %v505
    %v507 = vpop.f32.mrf.mxu0
    %v508 = vpop.f32.mrf.mxu0
    %v509 = vadd.f32 %v358, %v508
    %v510 = vpop.f32.mrf.mxu0
    %511 = vmatprep.mubr.bf16.mxu0 0
    %512 = vmatmul.mubr.bf16.gmra.mxu0 %v331
    %v513 = vpop.f32.mrf.mxu0
    %v514 = vadd.f32 %v358, %v513
    %v515 = vpop.f32.mrf.mxu0
    %v516 = vpop.f32.mrf.mxu0
    %v517 = vadd.f32 %v358, %v516
    %v518 = vpop.f32.mrf.mxu0
    %519 = vmatprep.mubr.bf16.mxu0 0
    %520 = vmatmul.mubr.bf16.gmra.mxu0 %v332
    %v521 = vpop.f32.mrf.mxu0
    %v522 = vadd.f32 %v358, %v521
    %v523 = vpop.f32.mrf.mxu0
    %v524 = vpop.f32.mrf.mxu0
    %v525 = vadd.f32 %v358, %v524
    %v526 = vpop.f32.mrf.mxu0
    %527 = vmatprep.mubr.bf16.mxu0 0
    %528 = vmatmul.mubr.bf16.gmra.mxu0 %v333
    %v529 = vpop.f32.mrf.mxu0
    %v530 = vadd.f32 %v358, %v529
    %v531 = vpop.f32.mrf.mxu0
    %v532 = vpop.f32.mrf.mxu0
    %v533 = vadd.f32 %v358, %v532
    %v534 = vpop.f32.mrf.mxu0
    %535 = vmatprep.mubr.bf16.mxu0 0
    %536 = vmatmul.mubr.bf16.gmra.mxu0 %v334
    %v537 = vpop.f32.mrf.mxu0
    %v538 = vadd.f32 %v358, %v537
    %v539 = vpop.f32.mrf.mxu0
    %v540 = vpop.f32.mrf.mxu0
    %v541 = vadd.f32 %v358, %v540
    %v542 = vpop.f32.mrf.mxu0
    %543 = vmatprep.mubr.bf16.mxu0 0
    %544 = vmatmul.mubr.bf16.gmra.mxu0 %v335
    %v545 = vpop.f32.mrf.mxu0
    %v546 = vadd.f32 %v358, %v545
    %v547 = vpop.f32.mrf.mxu0
    %v548 = vpop.f32.mrf.mxu0
    %v549 = vadd.f32 %v358, %v548
    %v550 = vpop.f32.mrf.mxu0
    %551 = vmatprep.mubr.bf16.mxu0 0
    %552 = vmatmul.mubr.bf16.gmra.mxu0 %v336
    %v553 = vpop.f32.mrf.mxu0
    %v554 = vadd.f32 %v358, %v553
    %v555 = vpop.f32.mrf.mxu0
    %v556 = vpop.f32.mrf.mxu0
    %v557 = vadd.f32 %v358, %v556
    %v558 = vpop.f32.mrf.mxu0
    %559 = vmatprep.mubr.bf16.mxu0 0
    %560 = vmatmul.mubr.bf16.gmra.mxu0 %v337
    %v561 = vpop.f32.mrf.mxu0
    %v562 = vadd.f32 %v358, %v561
    %v563 = vpop.f32.mrf.mxu0
    %v564 = vpop.f32.mrf.mxu0
    %v565 = vadd.f32 %v358, %v564
    %v566 = vpop.f32.mrf.mxu0
    %567 = vdwg.mxu0
    %v568 = vmax.f32 %v442, 0.0
    %v569 = vmax.f32 %v445, 0.0
    %v570 = vmax.f32 %v450, 0.0
    %v571 = vmax.f32 %v453, 0.0
    %v572 = vmax.f32 %v458, 0.0
    %v573 = vmax.f32 %v461, 0.0
    %v574 = vmax.f32 %v466, 0.0
    %v575 = vmax.f32 %v469, 0.0
    %v576 = vmax.f32 %v474, 0.0
    %v577 = vmax.f32 %v477, 0.0
    %v578 = vmax.f32 %v482, 0.0
    %v579 = vmax.f32 %v485, 0.0
    %v580 = vmax.f32 %v490, 0.0
    %v581 = vmax.f32 %v493, 0.0
    %v582 = vmax.f32 %v498, 0.0
    %v583 = vmax.f32 %v501, 0.0
    %v584 = vmax.f32 %v506, 0.0
    %v585 = vmax.f32 %v509, 0.0
    %v586 = vmax.f32 %v514, 0.0
    %v587 = vmax.f32 %v517, 0.0
    %v588 = vmax.f32 %v522, 0.0
    %v589 = vmax.f32 %v525, 0.0
    %v590 = vmax.f32 %v530, 0.0
    %v591 = vmax.f32 %v533, 0.0
    %v592 = vmax.f32 %v538, 0.0
    %v593 = vmax.f32 %v541, 0.0
    %v594 = vmax.f32 %v546, 0.0
    %v595 = vmax.f32 %v549, 0.0
    %v596 = vmax.f32 %v554, 0.0
    %v597 = vmax.f32 %v557, 0.0
    %v598 = vmax.f32 %v562, 0.0
    %v599 = vmax.f32 %v565, 0.0
    %v600 = vpack.c.bf16 %v569, %v568
    %v601 = vpack.c.bf16 %v571, %v570
    %v602 = vpack.c.bf16 %v573, %v572
    %v603 = vpack.c.bf16 %v575, %v574
    %v604 = vpack.c.bf16 %v577, %v576
    %v605 = vpack.c.bf16 %v579, %v578
    %v606 = vpack.c.bf16 %v581, %v580
    %v607 = vpack.c.bf16 %v583, %v582
    %v608 = vpack.c.bf16 %v585, %v584
    %v609 = vpack.c.bf16 %v587, %v586
    %v610 = vpack.c.bf16 %v589, %v588
    %v611 = vpack.c.bf16 %v591, %v590
    %v612 = vpack.c.bf16 %v593, %v592
    %v613 = vpack.c.bf16 %v595, %v594
    %v614 = vpack.c.bf16 %v597, %v596
    %v615 = vpack.c.bf16 %v599, %v598
    %v616 = vld [vmem:[%s3] sm:$0xf]
    %v617 = vld [vmem:[%s3 + $0x4] sm:$0xf]
    %v618 = vld [vmem:[%s3 + $0x8] sm:$0xf]
    %v619 = vld [vmem:[%s3 + $0xc] sm:$0xf]
    %v620 = vld [vmem:[%s3 + $0x10] sm:$0xf]
    %v621 = vld [vmem:[%s3 + $0x14] sm:$0xf]
    %v622 = vld [vmem:[%s3 + $0x18] sm:$0xf]
    %v623 = vld [vmem:[%s3 + $0x1c] sm:$0xf]
    %v624 = vld [vmem:[%s3 + $0x20] sm:$0xf]
    %v625 = vld [vmem:[%s3 + $0x24] sm:$0xf]
    %v626 = vld [vmem:[%s3 + $0x28] sm:$0xf]
    %v627 = vld [vmem:[%s3 + $0x2c] sm:$0xf]
    %v628 = vld [vmem:[%s3 + $0x30] sm:$0xf]
    %v629 = vld [vmem:[%s3 + $0x34] sm:$0xf]
    %v630 = vld [vmem:[%s3 + $0x38] sm:$0xf]
    %v631 = vld [vmem:[%s3 + $0x3c] sm:$0xf]
    %v632 = vld [vmem:[%s4 + $0x2] sm:$0x1]
    %v633 = vlaneseq
    %v634 = vshrl.u32 %v633, 7
    %v635 = vsub.s32 0, %v634
    %v636 = vrot.slane %v632, %v635
    %v653 = vunpack.c.l.b16 %v616
    %v654 = vunpack.c.l.b16 %v617
    %v655 = vunpack.c.l.b16 %v618
    %v656 = vunpack.c.l.b16 %v619
    %v657 = vunpack.c.l.b16 %v620
    %v658 = vunpack.c.l.b16 %v621
    %v659 = vunpack.c.l.b16 %v622
    %v660 = vunpack.c.l.b16 %v623
    %v661 = vunpack.c.l.b16 %v624
    %v662 = vunpack.c.l.b16 %v625
    %v663 = vunpack.c.l.b16 %v626
    %v664 = vunpack.c.l.b16 %v627
    %v665 = vunpack.c.l.b16 %v628
    %v666 = vunpack.c.l.b16 %v629
    %v667 = vunpack.c.l.b16 %v630
    %v668 = vunpack.c.l.b16 %v631
    %v669 = vpack.c.b16 %v654, %v653
    %v670 = vpack.c.b16 %v656, %v655
    %v671 = vpack.c.b16 %v658, %v657
    %v672 = vpack.c.b16 %v660, %v659
    %v673 = vpack.c.b16 %v662, %v661
    %v674 = vpack.c.b16 %v664, %v663
    %v675 = vpack.c.b16 %v666, %v665
    %v676 = vpack.c.b16 %v668, %v667
    %685 = vmatprep.subr.bf16.mxu0 0
    %686 = vmatpush1.bf16.msra.mxu0 %v676
    %687 = vmatprep.subr.bf16.mxu0 0
    %688 = vmatpush1.bf16.msra.mxu0 %v675
    %689 = vmatprep.subr.bf16.mxu0 0
    %690 = vmatpush1.bf16.msra.mxu0 %v674
    %691 = vmatprep.subr.bf16.mxu0 0
    %692 = vmatpush1.bf16.msra.mxu0 %v673
    %693 = vmatprep.subr.bf16.mxu0 0
    %694 = vmatpush1.bf16.msra.mxu0 %v672
    %695 = vmatprep.subr.bf16.mxu0 0
    %696 = vmatpush1.bf16.msra.mxu0 %v671
    %697 = vmatprep.subr.bf16.mxu0 0
    %698 = vmatpush1.bf16.msra.mxu0 %v670
    %699 = vmatprep.subr.bf16.mxu0 0
    %700 = vmatpush1.bf16.msra.mxu0 %v669
    %701 = vmatprep.subr.bf16.mxu0 0
    %702 = vmatpush2.bf16.msra.mxu0 0
    %703 = vmatprep.subr.bf16.mxu0 0
    %704 = vmatpush2.bf16.msra.mxu0 0
    %705 = vmatprep.subr.bf16.mxu0 0
    %706 = vmatpush2.bf16.msra.mxu0 0
    %707 = vmatprep.subr.bf16.mxu0 0
    %708 = vmatpush2.bf16.msra.mxu0 0
    %709 = vmatprep.subr.bf16.mxu0 0
    %710 = vmatpush2.bf16.msra.mxu0 0
    %711 = vmatprep.subr.bf16.mxu0 0
    %712 = vmatpush2.bf16.msra.mxu0 0
    %713 = vmatprep.subr.bf16.mxu0 0
    %714 = vmatpush2.bf16.msra.mxu0 0
    %715 = vmatprep.subr.bf16.mxu0 0
    %716 = vmatpush2.bf16.msra.mxu0 0
    %717 = vmatprep.mubr.bf16.mxu0 0
    %718 = vmatmul.mubr.bf16.gmra.mxu0 %v600
    %v719 = vpop.f32.mrf.mxu0
    %v720 = vadd.f32 %v636, %v719
    %v721 = vpop.f32.mrf.mxu0
    %v722 = vpop.f32.mrf.mxu0
    %v723 = vadd.f32 %v636, %v722
    %v724 = vpop.f32.mrf.mxu0
    %725 = vmatprep.mubr.bf16.mxu0 0
    %726 = vmatmul.mubr.bf16.gmra.mxu0 %v601
    %v727 = vpop.f32.mrf.mxu0
    %v728 = vadd.f32 %v636, %v727
    %v729 = vpop.f32.mrf.mxu0
    %v730 = vpop.f32.mrf.mxu0
    %v731 = vadd.f32 %v636, %v730
    %v732 = vpop.f32.mrf.mxu0
    %733 = vmatprep.mubr.bf16.mxu0 0
    %734 = vmatmul.mubr.bf16.gmra.mxu0 %v602
    %v735 = vpop.f32.mrf.mxu0
    %v736 = vadd.f32 %v636, %v735
    %v737 = vpop.f32.mrf.mxu0
    %v738 = vpop.f32.mrf.mxu0
    %v739 = vadd.f32 %v636, %v738
    %v740 = vpop.f32.mrf.mxu0
    %741 = vmatprep.mubr.bf16.mxu0 0
    %742 = vmatmul.mubr.bf16.gmra.mxu0 %v603
    %v743 = vpop.f32.mrf.mxu0
    %v744 = vadd.f32 %v636, %v743
    %v745 = vpop.f32.mrf.mxu0
    %v746 = vpop.f32.mrf.mxu0
    %v747 = vadd.f32 %v636, %v746
    %v748 = vpop.f32.mrf.mxu0
    %749 = vmatprep.mubr.bf16.mxu0 0
    %750 = vmatmul.mubr.bf16.gmra.mxu0 %v604
    %v751 = vpop.f32.mrf.mxu0
    %v752 = vadd.f32 %v636, %v751
    %v753 = vpop.f32.mrf.mxu0
    %v754 = vpop.f32.mrf.mxu0
    %v755 = vadd.f32 %v636, %v754
    %v756 = vpop.f32.mrf.mxu0
    %757 = vmatprep.mubr.bf16.mxu0 0
    %758 = vmatmul.mubr.bf16.gmra.mxu0 %v605
    %v759 = vpop.f32.mrf.mxu0
    %v760 = vadd.f32 %v636, %v759
    %v761 = vpop.f32.mrf.mxu0
    %v762 = vpop.f32.mrf.mxu0
    %v763 = vadd.f32 %v636, %v762
    %v764 = vpop.f32.mrf.mxu0
    %765 = vmatprep.mubr.bf16.mxu0 0
    %766 = vmatmul.mubr.bf16.gmra.mxu0 %v606
    %v767 = vpop.f32.mrf.mxu0
    %v768 = vadd.f32 %v636, %v767
    %v769 = vpop.f32.mrf.mxu0
    %v770 = vpop.f32.mrf.mxu0
    %v771 = vadd.f32 %v636, %v770
    %v772 = vpop.f32.mrf.mxu0
    %773 = vmatprep.mubr.bf16.mxu0 0
    %774 = vmatmul.mubr.bf16.gmra.mxu0 %v607
    %v775 = vpop.f32.mrf.mxu0
    %v776 = vadd.f32 %v636, %v775
    %v777 = vpop.f32.mrf.mxu0
    %v778 = vpop.f32.mrf.mxu0
    %v779 = vadd.f32 %v636, %v778
    %v780 = vpop.f32.mrf.mxu0
    %781 = vmatprep.mubr.bf16.mxu0 0
    %782 = vmatmul.mubr.bf16.gmra.mxu0 %v608
    %v783 = vpop.f32.mrf.mxu0
    %v784 = vadd.f32 %v636, %v783
    %v785 = vpop.f32.mrf.mxu0
    %v786 = vpop.f32.mrf.mxu0
    %v787 = vadd.f32 %v636, %v786
    %v788 = vpop.f32.mrf.mxu0
    %789 = vmatprep.mubr.bf16.mxu0 0
    %790 = vmatmul.mubr.bf16.gmra.mxu0 %v609
    %v791 = vpop.f32.mrf.mxu0
    %v792 = vadd.f32 %v636, %v791
    %v793 = vpop.f32.mrf.mxu0
    %v794 = vpop.f32.mrf.mxu0
    %v795 = vadd.f32 %v636, %v794
    %v796 = vpop.f32.mrf.mxu0
    %797 = vmatprep.mubr.bf16.mxu0 0
    %798 = vmatmul.mubr.bf16.gmra.mxu0 %v610
    %v799 = vpop.f32.mrf.mxu0
    %v800 = vadd.f32 %v636, %v799
    %v801 = vpop.f32.mrf.mxu0
    %v802 = vpop.f32.mrf.mxu0
    %v803 = vadd.f32 %v636, %v802
    %v804 = vpop.f32.mrf.mxu0
    %805 = vmatprep.mubr.bf16.mxu0 0
    %806 = vmatmul.mubr.bf16.gmra.mxu0 %v611
    %v807 = vpop.f32.mrf.mxu0
    %v808 = vadd.f32 %v636, %v807
    %v809 = vpop.f32.mrf.mxu0
    %v810 = vpop.f32.mrf.mxu0
    %v811 = vadd.f32 %v636, %v810
    %v812 = vpop.f32.mrf.mxu0
    %813 = vmatprep.mubr.bf16.mxu0 0
    %814 = vmatmul.mubr.bf16.gmra.mxu0 %v612
    %v815 = vpop.f32.mrf.mxu0
    %v816 = vadd.f32 %v636, %v815
    %v817 = vpop.f32.mrf.mxu0
    %v818 = vpop.f32.mrf.mxu0
    %v819 = vadd.f32 %v636, %v818
    %v820 = vpop.f32.mrf.mxu0
    %821 = vmatprep.mubr.bf16.mxu0 0
    %822 = vmatmul.mubr.bf16.gmra.mxu0 %v613
    %v823 = vpop.f32.mrf.mxu0
    %v824 = vadd.f32 %v636, %v823
    %v825 = vpop.f32.mrf.mxu0
    %v826 = vpop.f32.mrf.mxu0
    %v827 = vadd.f32 %v636, %v826
    %v828 = vpop.f32.mrf.mxu0
    %829 = vmatprep.mubr.bf16.mxu0 0
    %830 = vmatmul.mubr.bf16.gmra.mxu0 %v614
    %v831 = vpop.f32.mrf.mxu0
    %v832 = vadd.f32 %v636, %v831
    %v833 = vpop.f32.mrf.mxu0
    %v834 = vpop.f32.mrf.mxu0
    %v835 = vadd.f32 %v636, %v834
    %v836 = vpop.f32.mrf.mxu0
    %837 = vmatprep.mubr.bf16.mxu0 0
    %838 = vmatmul.mubr.bf16.gmra.mxu0 %v615
    %v839 = vpop.f32.mrf.mxu0
    %v840 = vadd.f32 %v636, %v839
    %v841 = vpop.f32.mrf.mxu0
    %v842 = vpop.f32.mrf.mxu0
    %v843 = vadd.f32 %v636, %v842
    %v844 = vpop.f32.mrf.mxu0
    %845 = vdwg.mxu0
    %v846 = vpack.c.bf16 %v723, %v720
    %v847 = vpack.c.bf16 %v731, %v728
    %v848 = vpack.c.bf16 %v739, %v736
    %v849 = vpack.c.bf16 %v747, %v744
    %v850 = vpack.c.bf16 %v755, %v752
    %v851 = vpack.c.bf16 %v763, %v760
    %v852 = vpack.c.bf16 %v771, %v768
    %v853 = vpack.c.bf16 %v779, %v776
    %v854 = vpack.c.bf16 %v787, %v784
    %v855 = vpack.c.bf16 %v795, %v792
    %v856 = vpack.c.bf16 %v803, %v800
    %v857 = vpack.c.bf16 %v811, %v808
    %v858 = vpack.c.bf16 %v819, %v816
    %v859 = vpack.c.bf16 %v827, %v824
    %v860 = vpack.c.bf16 %v835, %v832
    %v861 = vpack.c.bf16 %v843, %v840
    %v878 = vunpack.c.l.b16 %v846
    %v879 = vunpack.c.h.b16 %v846
    %v880 = vunpack.c.l.b16 %v847
    %v881 = vunpack.c.h.b16 %v847
    %v882 = vunpack.c.l.b16 %v848
    %v883 = vunpack.c.h.b16 %v848
    %v884 = vunpack.c.l.b16 %v849
    %v885 = vunpack.c.h.b16 %v849
    %v886 = vunpack.c.l.b16 %v850
    %v887 = vunpack.c.h.b16 %v850
    %v888 = vunpack.c.l.b16 %v851
    %v889 = vunpack.c.h.b16 %v851
    %v890 = vunpack.c.l.b16 %v852
    %v891 = vunpack.c.h.b16 %v852
    %v892 = vunpack.c.l.b16 %v853
    %v893 = vunpack.c.h.b16 %v853
    %v894 = vunpack.c.l.b16 %v854
    %v895 = vunpack.c.h.b16 %v854
    %v896 = vunpack.c.l.b16 %v855
    %v897 = vunpack.c.h.b16 %v855
    %v898 = vunpack.c.l.b16 %v856
    %v899 = vunpack.c.h.b16 %v856
    %v900 = vunpack.c.l.b16 %v857
    %v901 = vunpack.c.h.b16 %v857
    %v902 = vunpack.c.l.b16 %v858
    %v903 = vunpack.c.h.b16 %v858
    %v904 = vunpack.c.l.b16 %v859
    %v905 = vunpack.c.h.b16 %v859
    %v906 = vunpack.c.l.b16 %v860
    %v907 = vunpack.c.h.b16 %v860
    %v908 = vunpack.c.l.b16 %v861
    %v909 = vunpack.c.h.b16 %v861
    %v910 = vpack.c.b16 %v878, %v878
    %v911 = vpack.c.b16 %v879, %v879
    %v912 = vpack.c.b16 %v880, %v880
    %v913 = vpack.c.b16 %v881, %v881
    %v914 = vpack.c.b16 %v882, %v882
    %v915 = vpack.c.b16 %v883, %v883
    %v916 = vpack.c.b16 %v884, %v884
    %v917 = vpack.c.b16 %v885, %v885
    %v918 = vpack.c.b16 %v886, %v886
    %v919 = vpack.c.b16 %v887, %v887
    %v920 = vpack.c.b16 %v888, %v888
    %v921 = vpack.c.b16 %v889, %v889
    %v922 = vpack.c.b16 %v890, %v890
    %v923 = vpack.c.b16 %v891, %v891
    %v924 = vpack.c.b16 %v892, %v892
    %v925 = vpack.c.b16 %v893, %v893
    %v926 = vpack.c.b16 %v894, %v894
    %v927 = vpack.c.b16 %v895, %v895
    %v928 = vpack.c.b16 %v896, %v896
    %v929 = vpack.c.b16 %v897, %v897
    %v930 = vpack.c.b16 %v898, %v898
    %v931 = vpack.c.b16 %v899, %v899
    %v932 = vpack.c.b16 %v900, %v900
    %v933 = vpack.c.b16 %v901, %v901
    %v934 = vpack.c.b16 %v902, %v902
    %v935 = vpack.c.b16 %v903, %v903
    %v936 = vpack.c.b16 %v904, %v904
    %v937 = vpack.c.b16 %v905, %v905
    %v938 = vpack.c.b16 %v906, %v906
    %v939 = vpack.c.b16 %v907, %v907
    %v940 = vpack.c.b16 %v908, %v908
    %v941 = vpack.c.b16 %v909, %v909
    %974 = vst [vmem:[#allocation2] sm:$0xf] %v910
    %975 = vst [vmem:[#allocation2 + $0x4] sm:$0xf] %v911
    %976 = vst [vmem:[#allocation2 + $0x8] sm:$0xf] %v912
    %977 = vst [vmem:[#allocation2 + $0xc] sm:$0xf] %v913
    %978 = vst [vmem:[#allocation2 + $0x10] sm:$0xf] %v914
    %979 = vst [vmem:[#allocation2 + $0x14] sm:$0xf] %v915
    %980 = vst [vmem:[#allocation2 + $0x18] sm:$0xf] %v916
    %981 = vst [vmem:[#allocation2 + $0x1c] sm:$0xf] %v917
    %982 = vst [vmem:[#allocation2 + $0x20] sm:$0xf] %v918
    %983 = vst [vmem:[#allocation2 + $0x24] sm:$0xf] %v919
    %984 = vst [vmem:[#allocation2 + $0x28] sm:$0xf] %v920
    %985 = vst [vmem:[#allocation2 + $0x2c] sm:$0xf] %v921
    %986 = vst [vmem:[#allocation2 + $0x30] sm:$0xf] %v922
    %987 = vst [vmem:[#allocation2 + $0x34] sm:$0xf] %v923
    %988 = vst [vmem:[#allocation2 + $0x38] sm:$0xf] %v924
    %989 = vst [vmem:[#allocation2 + $0x3c] sm:$0xf] %v925
    %990 = vst [vmem:[#allocation2 + $0x40] sm:$0xf] %v926
    %991 = vst [vmem:[#allocation2 + $0x44] sm:$0xf] %v927
    %992 = vst [vmem:[#allocation2 + $0x48] sm:$0xf] %v928
    %993 = vst [vmem:[#allocation2 + $0x4c] sm:$0xf] %v929
    %994 = vst [vmem:[#allocation2 + $0x50] sm:$0xf] %v930
    %995 = vst [vmem:[#allocation2 + $0x54] sm:$0xf] %v931
    %996 = vst [vmem:[#allocation2 + $0x58] sm:$0xf] %v932
    %997 = vst [vmem:[#allocation2 + $0x5c] sm:$0xf] %v933
    %998 = vst [vmem:[#allocation2 + $0x60] sm:$0xf] %v934
    %999 = vst [vmem:[#allocation2 + $0x64] sm:$0xf] %v935
    %1000 = vst [vmem:[#allocation2 + $0x68] sm:$0xf] %v936
    %1001 = vst [vmem:[#allocation2 + $0x6c] sm:$0xf] %v937
    %1002 = vst [vmem:[#allocation2 + $0x70] sm:$0xf] %v938
    %1003 = vst [vmem:[#allocation2 + $0x74] sm:$0xf] %v939
    %1004 = vst [vmem:[#allocation2 + $0x78] sm:$0xf] %v940
    %1005 = vst [vmem:[#allocation2 + $0x7c] sm:$0xf] %v941
    // Predicated region
    $region22: #{tpu_custom_call.1} parent=1 // pred_check
      _
    $region23: #{tpu_custom_call.1} parent=1 // pred_check_branch
      %1007 = sbr.rel (0) target = $region25
    $region24: #{tpu_custom_call.1} parent=1 // pred_region
      %s1009 = ssub.s32 2048, 2048
      %1010 = vsyncadd [#allocation3], %s1009
      %s1011 = sshll.u32 [#allocation2], 4
      %s1012 = int_to_ptr.vmem [resolvable:$true] %s1011
      %1017 = dma.vmem_to_hbm [thread:$0]  %s1012, 2048, %s5, [#allocation3], 64, 64, 4
    $region25: #{tpu_custom_call.1} parent=1 // pred_fallthru
      _
    // Predicated region
    $region26: #{tpu_custom_call.1} parent=1 // pred_check
      _
    $region27: #{tpu_custom_call.1} parent=1 // pred_check_branch
      %1019 = sbr.rel (0) target = $region29
    $region28: #{tpu_custom_call.1} parent=1 // pred_region
      %1020 = dma.done [#allocation3], 2048
    $region29: #{tpu_custom_call.1} parent=1 // pred_fallthru
      _
    %1021 = vsyncpa [#allocation3], 1

</llo_original>
